<compile_context>
chip_gen: v7x
topology: tpu7x:2x2x1
jax: 0.10.0
libtpu: 0.0.40
codegen_flags: <defaults>
</compile_context>

<pallas_src>
import functools

import jax
import jax.numpy as jnp
from jax.experimental import pallas as pl
from jax.experimental.pallas import tpu as pltpu

EPS = 1e-5  # PyTorch GroupNorm default eps


def saom_kernel(x_ref, gamma_ref, beta_ref, wg_ref, gmat_ref,
                w1t_ref, b1_ref, w2t_ref, b2_ref, sc_ref, o_ref,
                *, half_c, inv_hw):
    x = x_ref[...].astype(jnp.float32)        # (nb, C, HW)

    gamma = gamma_ref[...]                    # (1, C)
    beta = beta_ref[...]                      # (1, C)
    wg = wg_ref[...]                          # (1, C) = gamma / sum(gamma)

    # ---- per-channel sums (lane-axis reduce) ----
    s = jnp.sum(x, axis=2)                    # (nb, C)
    ssq = jnp.sum(x * x, axis=2)              # (nb, C)

    # ---- GroupNorm statistics: two small MXU dots against the pre-scaled
    #      group-membership matrix (gmat already divided by cpg*HW) ----
    g_mean = jnp.dot(s, gmat_ref[...], preferred_element_type=jnp.float32)
    g_meansq = jnp.dot(ssq, gmat_ref[...], preferred_element_type=jnp.float32)
    g_var = jnp.maximum(g_meansq - g_mean * g_mean, 0.0)   # clamp cancellation
    inv_std = jax.lax.rsqrt(g_var + EPS)                     # (nb, C)

    # ---- channel attention: avg pool -> 1x1 conv -> relu -> 1x1 conv -> sigmoid ----
    pooled = s * inv_hw                                                # (nb, C)
    h = jnp.dot(pooled, w1t_ref[...],
                preferred_element_type=jnp.float32) + b1_ref[...]      # (nb, Cq)
    h = jnp.maximum(h, 0.0)
    att = jax.nn.sigmoid(
        jnp.dot(h, w2t_ref[...],
                preferred_element_type=jnp.float32) + b2_ref[...])     # (nb, C)

    # ---- fold affine + gating scales into one per-channel FMA:
    #      reweights = sigmoid(((x - mu)*inv_std*gamma + beta) * wg * att)
    #                = sigmoid(x * A + B)
    a = inv_std * gamma
    b = beta - g_mean * a
    scale = wg * att
    A = a * scale                              # (nb, C)
    B = b * scale                              # (nb, C)

    thr = sc_ref[0]
    w00 = sc_ref[1]
    w01 = sc_ref[2]
    w10 = sc_ref[3]
    w11 = sc_ref[4]

    # ---- gate + adaptive reconstruct, per channel-half; outputs written
    #      directly so no full-slab x1 / x2 / rwx temporaries round-trip VMEM.
    #      keep = where(rw > thr, x, rw*x); drop = where(rw > thr, 0, rw*x)
    x_t = x[:, :half_c, :]
    x_b = x[:, half_c:, :]
    rw_t = jax.nn.sigmoid(x_t * A[:, :half_c, None] + B[:, :half_c, None])
    rw_b = jax.nn.sigmoid(x_b * A[:, half_c:, None] + B[:, half_c:, None])
    cond_t = rw_t > thr
    cond_b = rw_b > thr
    rwx_t = rw_t * x_t
    rwx_b = rw_b * x_b
    o_ref[:, :half_c, :] = (w00 * jnp.where(cond_t, x_t, rwx_t)
                            + w01 * jnp.where(cond_b, 0.0, rwx_b)).astype(o_ref.dtype)
    o_ref[:, half_c:, :] = (w10 * jnp.where(cond_b, x_b, rwx_b)
                            + w11 * jnp.where(cond_t, 0.0, rwx_t)).astype(o_ref.dtype)


def _vmem_capacity_bytes():
    """Best-effort trace-time VMEM query; conservative (v7x) default on failure."""
    try:
        info = pltpu.get_tpu_info()
        cap = getattr(info, "vmem_capacity_bytes", None)
        if cap:
            return int(cap)
    except Exception:
        pass
    return 64 * 1024 * 1024


def saom_pallas(x, params, group_num=16):
    N, C, H, W = x.shape
    HW = H * W
    Cq = C // 4
    half_c = C // 2
    cpg = C // group_num
    itemsize = jnp.dtype(x.dtype).itemsize

    # Keep the spatial axis at its true extent (full-extent last dim is a legal
    # BlockSpec) -- no jnp.pad / trailing slice, no extra HBM traffic.
    x3 = x.reshape(N, C, HW)

    gamma = params["gn_weight"].reshape(1, C).astype(jnp.float32)
    beta = params["gn_bias"].reshape(1, C).astype(jnp.float32)
    wg = gamma / jnp.sum(gamma)                                   # hoisted out of kernel

    W1T = params["w1"].astype(jnp.float32).T                      # (C, Cq)
    b1 = params["b1"].reshape(1, Cq).astype(jnp.float32)
    W2T = params["w2"].astype(jnp.float32).T                      # (Cq, C)
    b2 = params["b2"].reshape(1, C).astype(jnp.float32)

    groups = jnp.arange(C) // cpg
    gmat = ((groups[:, None] == groups[None, :]).astype(jnp.float32)
            / float(cpg * HW))                                    # pre-scaled (C, C)

    rw = jax.nn.softmax(params["reconstruct_weights"].astype(jnp.float32), axis=0)
    scalars = jnp.stack([
        params["gate_threshold"].astype(jnp.float32),
        rw[0, 0], rw[0, 1], rw[1, 0], rw[1, 1],
    ]).astype(jnp.float32)                                        # (5,) SMEM scalars

    # ---- tiling: largest batch block whose estimated VMEM footprint fits the
    #      derived limit, capped so the grid has >= 2 steps (v7x megacore)
    #      whenever N >= 2.  nb need not divide N (cdiv grid; ragged tail is
    #      masked on the output write and batch rows are independent).
    vmem_cap = _vmem_capacity_bytes()
    vmem_limit = min((vmem_cap * 3) // 4, 100 * 1024 * 1024)
    # per-batch-element footprint: in+out double-buffered in native dtype plus
    # ~4 live f32 slab-sized temporaries (x_f32, reweights, rwx, output expr).
    per_elem = C * HW * (4 * itemsize + 4 * 4)
    nb = max(1, int(vmem_limit * 0.8) // max(per_elem, 1))
    nb = min(nb, N)
    if N >= 2:
        nb = min(nb, pl.cdiv(N, 2))
    grid = (pl.cdiv(N, nb),)
    # TODO(synk): for very large C*H*W where even nb=1 overflows VMEM, chunk the
    # spatial axis with a two-pass (reduce-then-apply) inner pipeline.

    kernel = functools.partial(saom_kernel, half_c=half_c, inv_hw=1.0 / float(HW))

    param_bytes = 4 * (4 * C + C * C + 2 * C * Cq + Cq + 5)
    cost = pl.CostEstimate(
        flops=int(12 * N * C * HW + 2 * N * (2 * C * C + 2 * C * Cq)),
        transcendentals=int(N * C * HW + 2 * N * C),
        bytes_accessed=int(2 * N * C * HW * itemsize + param_bytes),
    )

    out = pl.pallas_call(
        kernel,
        out_shape=jax.ShapeDtypeStruct((N, C, HW), x.dtype),
        grid=grid,
        in_specs=[
            pl.BlockSpec((nb, C, HW), lambda n: (n, 0, 0)),     # x (native dtype)
            pl.BlockSpec((1, C), lambda n: (0, 0)),             # gamma
            pl.BlockSpec((1, C), lambda n: (0, 0)),             # beta
            pl.BlockSpec((1, C), lambda n: (0, 0)),             # w_gamma
            pl.BlockSpec((C, C), lambda n: (0, 0)),             # pre-scaled group matrix
            pl.BlockSpec((C, Cq), lambda n: (0, 0)),            # conv1 weight (transposed)
            pl.BlockSpec((1, Cq), lambda n: (0, 0)),            # conv1 bias
            pl.BlockSpec((Cq, C), lambda n: (0, 0)),            # conv2 weight (transposed)
            pl.BlockSpec((1, C), lambda n: (0, 0)),             # conv2 bias
            pl.BlockSpec(memory_space=pltpu.MemorySpace.SMEM),  # [thr, w00, w01, w10, w11]
        ],
        out_specs=pl.BlockSpec((nb, C, HW), lambda n: (n, 0, 0)),
        compiler_params=pltpu.CompilerParams(
            dimension_semantics=("parallel",),      # batch blocks are independent
            vmem_limit_bytes=int(vmem_limit)),
        cost_estimate=cost,
    )(x3, gamma, beta, wg, gmat, W1T, b1, W2T, b2, scalars)

    return out.reshape(N, C, H, W)


def saom_ref(x, params, group_num=16):
    """Pure-JAX reference mirroring the PyTorch forward (NCHW)."""
    N, C, H, W = x.shape
    cpg = C // group_num
    xg = x.reshape(N, group_num, cpg, H, W)
    mean = xg.mean(axis=(2, 3, 4), keepdims=True)
    var = xg.var(axis=(2, 3, 4), keepdims=True)
    gn = ((xg - mean) / jnp.sqrt(var + EPS)).reshape(N, C, H, W)
    gamma = params["gn_weight"].reshape(1, C, 1, 1)
    beta = params["gn_bias"].reshape(1, C, 1, 1)
    gn_x = gn * gamma + beta

    pooled = x.mean(axis=(2, 3))                                    # (N, C)
    h = jnp.maximum(pooled @ params["w1"].T + params["b1"], 0.0)
    att = jax.nn.sigmoid(h @ params["w2"].T + params["b2"])          # (N, C)
    cw = att.reshape(N, C, 1, 1)

    w_gamma = (params["gn_weight"] / jnp.sum(params["gn_weight"])).reshape(1, C, 1, 1)
    reweights = jax.nn.sigmoid(gn_x * w_gamma * cw)
    thr = params["gate_threshold"]
    w1 = jnp.where(reweights > thr, jnp.ones_like(reweights), reweights)
    w2 = jnp.where(reweights > thr, jnp.zeros_like(reweights), reweights)
    x1 = w1 * x
    x2 = w2 * x

    wts = jax.nn.softmax(params["reconstruct_weights"], axis=0)
    half = C // 2
    x11, x12 = x1[:, :half], x1[:, half:]
    x21, x22 = x2[:, :half], x2[:, half:]
    out1 = wts[0, 0] * x11 + wts[0, 1] * x22
    out2 = wts[1, 0] * x12 + wts[1, 1] * x21
    return jnp.concatenate([out1, out2], axis=1)


if __name__ == "__main__":
    N, C, H, W = 2, 32, 16, 16
    group_num = 16

    key = jax.random.PRNGKey(0)
    ks = jax.random.split(key, 8)
    params = {
        "gn_weight": 1.0 + 0.1 * jax.random.normal(ks[0], (C,), jnp.float32),
        "gn_bias": 0.1 * jax.random.normal(ks[1], (C,), jnp.float32),
        "w1": 0.1 * jax.random.normal(ks[2], (C // 4, C), jnp.float32),
        "b1": 0.1 * jax.random.normal(ks[3], (C // 4,), jnp.float32),
        "w2": 0.1 * jax.random.normal(ks[4], (C, C // 4), jnp.float32),
        "b2": 0.1 * jax.random.normal(ks[5], (C,), jnp.float32),
        "reconstruct_weights": jnp.ones((2, 2), jnp.float32)
                               + 0.1 * jax.random.normal(ks[6], (2, 2), jnp.float32),
        "gate_threshold": jnp.float32(0.5),
    }
    x = jax.random.normal(ks[7], (N, C, H, W), jnp.float32)

    out = jax.block_until_ready(saom_pallas(x, params, group_num=group_num))
    ref = jax.block_until_ready(saom_ref(x, params, group_num=group_num))

    assert out.shape == (N, C, H, W)
    assert jnp.allclose(out, ref, rtol=2e-4, atol=2e-4), (
        f"max abs err {jnp.max(jnp.abs(out - ref))}")
    print("KERNEL_OK")
</pallas_src>

<mosaic_0001>
module attributes {stable_mosaic.version = 11 : i64} {
  func.func @saom_kernel(%arg0: i32, %arg1: memref<1x32x256xf32, #tpu.memory_space<vmem>>, %arg2: memref<1x32xf32, #tpu.memory_space<vmem>>, %arg3: memref<1x32xf32, #tpu.memory_space<vmem>>, %arg4: memref<1x32xf32, #tpu.memory_space<vmem>>, %arg5: memref<32x32xf32, #tpu.memory_space<vmem>>, %arg6: memref<32x8xf32, #tpu.memory_space<vmem>>, %arg7: memref<1x8xf32, #tpu.memory_space<vmem>>, %arg8: memref<8x32xf32, #tpu.memory_space<vmem>>, %arg9: memref<1x32xf32, #tpu.memory_space<vmem>>, %arg10: memref<5xf32, #tpu.memory_space<smem>>, %arg11: memref<1x32x256xf32, #tpu.memory_space<vmem>>) attributes {dimension_semantics = [#tpu.dimension_semantics<parallel>], iteration_bounds = array<i64: 2>, scalar_prefetch = 0 : i64, scratch_operands = 0 : i64, tpu.core_type = #tpu.core_type<tc>, window_params = [{transform_indices = @transform_0, window_bounds = array<i64: 1, 32, 256>}, {pipeline_mode = #tpu.pipeline_mode<synchronous>, transform_indices = @transform_1, window_bounds = array<i64: 1, 32>}, {pipeline_mode = #tpu.pipeline_mode<synchronous>, transform_indices = @transform_2, window_bounds = array<i64: 1, 32>}, {pipeline_mode = #tpu.pipeline_mode<synchronous>, transform_indices = @transform_3, window_bounds = array<i64: 1, 32>}, {pipeline_mode = #tpu.pipeline_mode<synchronous>, transform_indices = @transform_4, window_bounds = array<i64: 32, 32>}, {pipeline_mode = #tpu.pipeline_mode<synchronous>, transform_indices = @transform_5, window_bounds = array<i64: 32, 8>}, {pipeline_mode = #tpu.pipeline_mode<synchronous>, transform_indices = @transform_6, window_bounds = array<i64: 1, 8>}, {pipeline_mode = #tpu.pipeline_mode<synchronous>, transform_indices = @transform_7, window_bounds = array<i64: 8, 32>}, {pipeline_mode = #tpu.pipeline_mode<synchronous>, transform_indices = @transform_8, window_bounds = array<i64: 1, 32>}, {transform_indices = @transform_9, window_bounds = array<i64: 5>}, {transform_indices = @transform_10, window_bounds = array<i64: 1, 32, 256>}]} {
    %c0 = arith.constant 0 : index
    %c0_0 = arith.constant 0 : index
    %c0_1 = arith.constant 0 : index
    %0 = vector.load %arg1[%c0, %c0_0, %c0_1] : memref<1x32x256xf32, #tpu.memory_space<vmem>>, vector<1x32x256xf32>
    %c0_2 = arith.constant 0 : index
    %c0_3 = arith.constant 0 : index
    %1 = vector.load %arg2[%c0_2, %c0_3] : memref<1x32xf32, #tpu.memory_space<vmem>>, vector<1x32xf32>
    %c0_4 = arith.constant 0 : index
    %c0_5 = arith.constant 0 : index
    %2 = vector.load %arg3[%c0_4, %c0_5] : memref<1x32xf32, #tpu.memory_space<vmem>>, vector<1x32xf32>
    %c0_6 = arith.constant 0 : index
    %c0_7 = arith.constant 0 : index
    %3 = vector.load %arg4[%c0_6, %c0_7] : memref<1x32xf32, #tpu.memory_space<vmem>>, vector<1x32xf32>
    %cst = arith.constant dense<0.000000e+00> : vector<1x32xf32>
    %4 = vector.multi_reduction <add>, %0, %cst [2] : vector<1x32x256xf32> to vector<1x32xf32>
    %5 = arith.mulf %0, %0 : vector<1x32x256xf32>
    %cst_8 = arith.constant dense<0.000000e+00> : vector<1x32xf32>
    %6 = vector.multi_reduction <add>, %5, %cst_8 [2] : vector<1x32x256xf32> to vector<1x32xf32>
    %c0_9 = arith.constant 0 : index
    %c0_10 = arith.constant 0 : index
    %7 = vector.load %arg5[%c0_9, %c0_10] : memref<32x32xf32, #tpu.memory_space<vmem>>, vector<32x32xf32>
    %cst_11 = arith.constant dense<0.000000e+00> : vector<1x32xf32>
    %8 = tpu.matmul %4, %7, %cst_11 {dimension_numbers = #tpu.dot_dimension_numbers<[1], [0], [0], [1], [0, 0, 1, 1], [], []>} : vector<1x32xf32>, vector<32x32xf32>, vector<1x32xf32> -> vector<1x32xf32>
    %c0_12 = arith.constant 0 : index
    %c0_13 = arith.constant 0 : index
    %9 = vector.load %arg5[%c0_12, %c0_13] : memref<32x32xf32, #tpu.memory_space<vmem>>, vector<32x32xf32>
    %cst_14 = arith.constant dense<0.000000e+00> : vector<1x32xf32>
    %10 = tpu.matmul %6, %9, %cst_14 {dimension_numbers = #tpu.dot_dimension_numbers<[1], [0], [0], [1], [0, 0, 1, 1], [], []>} : vector<1x32xf32>, vector<32x32xf32>, vector<1x32xf32> -> vector<1x32xf32>
    %11 = arith.mulf %8, %8 : vector<1x32xf32>
    %12 = arith.subf %10, %11 : vector<1x32xf32>
    %cst_15 = arith.constant 0.000000e+00 : f32
    %13 = vector.broadcast %cst_15 : f32 to vector<1x32xf32>
    %14 = arith.maximumf %12, %13 : vector<1x32xf32>
    %cst_16 = arith.constant 9.99999974E-6 : f32
    %15 = vector.broadcast %cst_16 : f32 to vector<1x32xf32>
    %16 = arith.addf %14, %15 : vector<1x32xf32>
    %17 = math.rsqrt %16 : vector<1x32xf32>
    %cst_17 = arith.constant 3.906250e-03 : f32
    %18 = vector.broadcast %cst_17 : f32 to vector<1x32xf32>
    %19 = arith.mulf %4, %18 : vector<1x32xf32>
    %c0_18 = arith.constant 0 : index
    %c0_19 = arith.constant 0 : index
    %20 = vector.load %arg6[%c0_18, %c0_19] : memref<32x8xf32, #tpu.memory_space<vmem>>, vector<32x8xf32>
    %cst_20 = arith.constant dense<0.000000e+00> : vector<1x8xf32>
    %21 = tpu.matmul %19, %20, %cst_20 {dimension_numbers = #tpu.dot_dimension_numbers<[1], [0], [0], [1], [0, 0, 1, 1], [], []>} : vector<1x32xf32>, vector<32x8xf32>, vector<1x8xf32> -> vector<1x8xf32>
    %c0_21 = arith.constant 0 : index
    %c0_22 = arith.constant 0 : index
    %22 = vector.load %arg7[%c0_21, %c0_22] : memref<1x8xf32, #tpu.memory_space<vmem>>, vector<1x8xf32>
    %23 = arith.addf %21, %22 : vector<1x8xf32>
    %cst_23 = arith.constant 0.000000e+00 : f32
    %24 = vector.broadcast %cst_23 : f32 to vector<1x8xf32>
    %25 = arith.maximumf %23, %24 : vector<1x8xf32>
    %c0_24 = arith.constant 0 : index
    %c0_25 = arith.constant 0 : index
    %26 = vector.load %arg8[%c0_24, %c0_25] : memref<8x32xf32, #tpu.memory_space<vmem>>, vector<8x32xf32>
    %cst_26 = arith.constant dense<0.000000e+00> : vector<1x32xf32>
    %27 = tpu.matmul %25, %26, %cst_26 {dimension_numbers = #tpu.dot_dimension_numbers<[1], [0], [0], [1], [0, 0, 1, 1], [], []>} : vector<1x8xf32>, vector<8x32xf32>, vector<1x32xf32> -> vector<1x32xf32>
    %c0_27 = arith.constant 0 : index
    %c0_28 = arith.constant 0 : index
    %28 = vector.load %arg9[%c0_27, %c0_28] : memref<1x32xf32, #tpu.memory_space<vmem>>, vector<1x32xf32>
    %29 = arith.addf %27, %28 : vector<1x32xf32>
    %30 = arith.negf %29 : vector<1x32xf32>
    %31 = math.exp %30 : vector<1x32xf32>
    %cst_29 = arith.constant 1.000000e+00 : f32
    %32 = vector.broadcast %cst_29 : f32 to vector<1x32xf32>
    %33 = arith.addf %32, %31 : vector<1x32xf32>
    %34 = arith.divf %32, %33 : vector<1x32xf32>
    %35 = arith.mulf %17, %1 : vector<1x32xf32>
    %36 = arith.mulf %8, %35 : vector<1x32xf32>
    %37 = arith.subf %2, %36 : vector<1x32xf32>
    %38 = arith.mulf %3, %34 : vector<1x32xf32>
    %39 = arith.mulf %35, %38 : vector<1x32xf32>
    %40 = arith.mulf %37, %38 : vector<1x32xf32>
    %c0_30 = arith.constant 0 : index
    %41 = memref.load %arg10[%c0_30] : memref<5xf32, #tpu.memory_space<smem>>
    %c1 = arith.constant 1 : index
    %42 = memref.load %arg10[%c1] : memref<5xf32, #tpu.memory_space<smem>>
    %c2 = arith.constant 2 : index
    %43 = memref.load %arg10[%c2] : memref<5xf32, #tpu.memory_space<smem>>
    %c3 = arith.constant 3 : index
    %44 = memref.load %arg10[%c3] : memref<5xf32, #tpu.memory_space<smem>>
    %c4 = arith.constant 4 : index
    %45 = memref.load %arg10[%c4] : memref<5xf32, #tpu.memory_space<smem>>
    %46 = vector.extract_strided_slice %0 {offsets = [0, 0, 0], sizes = [1, 16, 256], strides = [1, 1, 1]} : vector<1x32x256xf32> to vector<1x16x256xf32>
    %47 = vector.extract_strided_slice %0 {offsets = [0, 16, 0], sizes = [1, 16, 256], strides = [1, 1, 1]} : vector<1x32x256xf32> to vector<1x16x256xf32>
    %48 = vector.extract_strided_slice %39 {offsets = [0, 0], sizes = [1, 16], strides = [1, 1]} : vector<1x32xf32> to vector<1x16xf32>
    %49 = vector.shape_cast %48 : vector<1x16xf32> to vector<1x16x1xf32>
    %50 = vector.broadcast %49 : vector<1x16x1xf32> to vector<1x16x256xf32>
    %51 = arith.mulf %46, %50 : vector<1x16x256xf32>
    %52 = vector.extract_strided_slice %40 {offsets = [0, 0], sizes = [1, 16], strides = [1, 1]} : vector<1x32xf32> to vector<1x16xf32>
    %53 = vector.shape_cast %52 : vector<1x16xf32> to vector<1x16x1xf32>
    %54 = vector.broadcast %53 : vector<1x16x1xf32> to vector<1x16x256xf32>
    %55 = arith.addf %51, %54 : vector<1x16x256xf32>
    %56 = arith.negf %55 : vector<1x16x256xf32>
    %57 = math.exp %56 : vector<1x16x256xf32>
    %cst_31 = arith.constant 1.000000e+00 : f32
    %58 = vector.broadcast %cst_31 : f32 to vector<1x16x256xf32>
    %59 = arith.addf %58, %57 : vector<1x16x256xf32>
    %60 = arith.divf %58, %59 : vector<1x16x256xf32>
    %61 = vector.extract_strided_slice %39 {offsets = [0, 16], sizes = [1, 16], strides = [1, 1]} : vector<1x32xf32> to vector<1x16xf32>
    %62 = vector.shape_cast %61 : vector<1x16xf32> to vector<1x16x1xf32>
    %63 = vector.broadcast %62 : vector<1x16x1xf32> to vector<1x16x256xf32>
    %64 = arith.mulf %47, %63 : vector<1x16x256xf32>
    %65 = vector.extract_strided_slice %40 {offsets = [0, 16], sizes = [1, 16], strides = [1, 1]} : vector<1x32xf32> to vector<1x16xf32>
    %66 = vector.shape_cast %65 : vector<1x16xf32> to vector<1x16x1xf32>
    %67 = vector.broadcast %66 : vector<1x16x1xf32> to vector<1x16x256xf32>
    %68 = arith.addf %64, %67 : vector<1x16x256xf32>
    %69 = arith.negf %68 : vector<1x16x256xf32>
    %70 = math.exp %69 : vector<1x16x256xf32>
    %cst_32 = arith.constant 1.000000e+00 : f32
    %71 = vector.broadcast %cst_32 : f32 to vector<1x16x256xf32>
    %72 = arith.addf %71, %70 : vector<1x16x256xf32>
    %73 = arith.divf %71, %72 : vector<1x16x256xf32>
    %74 = vector.broadcast %41 : f32 to vector<1x16x256xf32>
    %75 = arith.cmpf ogt, %60, %74 : vector<1x16x256xf32>
    %76 = vector.broadcast %41 : f32 to vector<1x16x256xf32>
    %77 = arith.cmpf ogt, %73, %76 : vector<1x16x256xf32>
    %78 = arith.mulf %60, %46 : vector<1x16x256xf32>
    %79 = arith.mulf %73, %47 : vector<1x16x256xf32>
    %80 = arith.select %75, %46, %78 : vector<1x16x256xi1>, vector<1x16x256xf32>
    %81 = vector.broadcast %42 : f32 to vector<1x16x256xf32>
    %82 = arith.mulf %81, %80 : vector<1x16x256xf32>
    %cst_33 = arith.constant 0.000000e+00 : f32
    %83 = vector.broadcast %cst_33 : f32 to vector<1x16x256xf32>
    %84 = arith.select %77, %83, %79 : vector<1x16x256xi1>, vector<1x16x256xf32>
    %85 = vector.broadcast %43 : f32 to vector<1x16x256xf32>
    %86 = arith.mulf %85, %84 : vector<1x16x256xf32>
    %87 = arith.addf %82, %86 : vector<1x16x256xf32>
    %c0_34 = arith.constant 0 : index
    %c0_35 = arith.constant 0 : index
    %c0_36 = arith.constant 0 : index
    %88 = vector.load %arg11[%c0_34, %c0_35, %c0_36] : memref<1x32x256xf32, #tpu.memory_space<vmem>>, vector<1x16x256xf32>
    tpu.vector_store %arg11[%c0_34, %c0_35, %c0_36], %87 {strides = array<i32>} : memref<1x32x256xf32, #tpu.memory_space<vmem>>, vector<1x16x256xf32>,
    %89 = arith.select %77, %47, %79 : vector<1x16x256xi1>, vector<1x16x256xf32>
    %90 = vector.broadcast %44 : f32 to vector<1x16x256xf32>
    %91 = arith.mulf %90, %89 : vector<1x16x256xf32>
    %cst_37 = arith.constant 0.000000e+00 : f32
    %92 = vector.broadcast %cst_37 : f32 to vector<1x16x256xf32>
    %93 = arith.select %75, %92, %78 : vector<1x16x256xi1>, vector<1x16x256xf32>
    %94 = vector.broadcast %45 : f32 to vector<1x16x256xf32>
    %95 = arith.mulf %94, %93 : vector<1x16x256xf32>
    %96 = arith.addf %91, %95 : vector<1x16x256xf32>
    %c0_38 = arith.constant 0 : index
    %c16 = arith.constant 16 : index
    %c0_39 = arith.constant 0 : index
    %97 = vector.load %arg11[%c0_38, %c16, %c0_39] : memref<1x32x256xf32, #tpu.memory_space<vmem>>, vector<1x16x256xf32>
    tpu.vector_store %arg11[%c0_38, %c16, %c0_39], %96 {strides = array<i32>} : memref<1x32x256xf32, #tpu.memory_space<vmem>>, vector<1x16x256xf32>,
    return
  }
  func.func @transform_0(%arg0: i32) -> (i32, i32, i32) {
    %c0_i32 = arith.constant 0 : i32
    %c0_i32_0 = arith.constant 0 : i32
    %c0_i32_1 = arith.constant 0 : i32
    return %arg0, %c0_i32, %c0_i32_0 : i32, i32, i32
  }
  func.func @transform_1(%arg0: i32) -> (i32, i32) {
    %c0_i32 = arith.constant 0 : i32
    %c0_i32_0 = arith.constant 0 : i32
    %c0_i32_1 = arith.constant 0 : i32
    return %c0_i32, %c0_i32_0 : i32, i32
  }
  func.func @transform_2(%arg0: i32) -> (i32, i32) {
    %c0_i32 = arith.constant 0 : i32
    %c0_i32_0 = arith.constant 0 : i32
    %c0_i32_1 = arith.constant 0 : i32
    return %c0_i32, %c0_i32_0 : i32, i32
  }
  func.func @transform_3(%arg0: i32) -> (i32, i32) {
    %c0_i32 = arith.constant 0 : i32
    %c0_i32_0 = arith.constant 0 : i32
    %c0_i32_1 = arith.constant 0 : i32
    return %c0_i32, %c0_i32_0 : i32, i32
  }
  func.func @transform_4(%arg0: i32) -> (i32, i32) {
    %c0_i32 = arith.constant 0 : i32
    %c0_i32_0 = arith.constant 0 : i32
    %c0_i32_1 = arith.constant 0 : i32
    return %c0_i32, %c0_i32_0 : i32, i32
  }
  func.func @transform_5(%arg0: i32) -> (i32, i32) {
    %c0_i32 = arith.constant 0 : i32
    %c0_i32_0 = arith.constant 0 : i32
    %c0_i32_1 = arith.constant 0 : i32
    return %c0_i32, %c0_i32_0 : i32, i32
  }
  func.func @transform_6(%arg0: i32) -> (i32, i32) {
    %c0_i32 = arith.constant 0 : i32
    %c0_i32_0 = arith.constant 0 : i32
    %c0_i32_1 = arith.constant 0 : i32
    return %c0_i32, %c0_i32_0 : i32, i32
  }
  func.func @transform_7(%arg0: i32) -> (i32, i32) {
    %c0_i32 = arith.constant 0 : i32
    %c0_i32_0 = arith.constant 0 : i32
    %c0_i32_1 = arith.constant 0 : i32
    return %c0_i32, %c0_i32_0 : i32, i32
  }
  func.func @transform_8(%arg0: i32) -> (i32, i32) {
    %c0_i32 = arith.constant 0 : i32
    %c0_i32_0 = arith.constant 0 : i32
    %c0_i32_1 = arith.constant 0 : i32
    return %c0_i32, %c0_i32_0 : i32, i32
  }
  func.func @transform_9(%arg0: i32) -> i32 {
    %c0_i32 = arith.constant 0 : i32
    %c0_i32_0 = arith.constant 0 : i32
    return %c0_i32 : i32
  }
  func.func @transform_10(%arg0: i32) -> (i32, i32, i32) {
    %c0_i32 = arith.constant 0 : i32
    %c0_i32_0 = arith.constant 0 : i32
    %c0_i32_1 = arith.constant 0 : i32
    return %arg0, %c0_i32, %c0_i32_0 : i32, i32, i32
  }
}

</mosaic_0001>

<llo_original>
// kernel: tpu_custom_call.1
$region0: #{tpu_custom_call.1}
  #allocation0 [shape = 'u32[]', space=smem, size = 0x4, offset = 0x4, fixed_abs, tag = 'smem constant byte address 0x4 - core index']
  #allocation1 [shape = 'u32[144,128]{1,0:T(1,128)}', space=vmem, size = 0x12000, scoped, tag = 'internal scratch']
  %s0 = inlined_call_operand.hbm [shape: f32[2,32,256], index: 0, kind: input, shape index: {}]
  %s1 = inlined_call_operand.vmem [shape: f32[1,32], index: 1, kind: input, shape index: {}]
  %s2 = inlined_call_operand.vmem [shape: f32[1,32], index: 2, kind: input, shape index: {}]
  %s3 = inlined_call_operand.vmem [shape: f32[1,32], index: 3, kind: input, shape index: {}]
  %s4 = inlined_call_operand.vmem [shape: f32[32,32], index: 4, kind: input, shape index: {}]
  %s5 = inlined_call_operand.vmem [shape: f32[32,8], index: 5, kind: input, shape index: {}]
  %s6 = inlined_call_operand.vmem [shape: f32[1,8], index: 6, kind: input, shape index: {}]
  %s7 = inlined_call_operand.vmem [shape: f32[8,32], index: 7, kind: input, shape index: {}]
  %s8 = inlined_call_operand.vmem [shape: f32[1,32], index: 8, kind: input, shape index: {}]
  %s9 = inlined_call_operand.vmem [shape: f32[5], index: 9, kind: input, shape index: {}]
  %s10 = inlined_call_operand.hbm [shape: f32[2,32,256], index: 10, kind: output, shape index: {}]
  %s11 = sld [smem:[#allocation0]]
  $region81: #{tpu_custom_call.1} parent=0
    _
  %s13 = ssub.s32 1, %s11
  %s14 = scalar_select 0, %s13, %s11
  $region1: #{tpu_custom_call.1} parent=0
    #allocation2 [shape = 'u8[65536]{0}', space=vmem, size = 0x10000, scoped, tag = 'input window, operand 0']
    #allocation3 [shape = 's32[2]{0}', space=sflag, size = 0x8, scoped, tag = 'scoped memory for tpu_custom_call.1']
    #allocation4 [shape = 's32[2]{0}', space=sflag, size = 0x8, scoped, tag = 'scoped memory for tpu_custom_call.1']
    #allocation5 [shape = 's32[2]{0}', space=sflag, size = 0x8, scoped, tag = 'scoped memory for tpu_custom_call.1']
    #allocation6 [shape = 'u8[512]{0}', space=smem, size = 0x200, scoped, tag = 'input window, operand 9, single buffered']
    #allocation7 [shape = 'u8[65536]{0}', space=vmem, size = 0x10000, scoped, tag = 'output window, operand 0']
    %15 = vsyncpa [#allocation3], 0
    %s16 = scalar_lea.sflag [#allocation3], 1
    %17 = vsyncpa %s16, 0
    %18 = vsyncpa [#allocation5], 0
    %19 = vsyncpa [#allocation4], 0
    %s20 = scalar_lea.sflag [#allocation4], 1
    %21 = vsyncpa %s20, 0
    loop: start=0, step=1, limit=4
    $region2: #{tpu_custom_call.1} parent=1 // loop_pre_header
      _
    $region3: #{tpu_custom_call.1} parent=1 // loop_header
      %s23 = sphi 0, %s27
      %p24 = scmp.ge.s32.totalorder %s23, 4
      %s33 = sphi 0, %s35
      %s36 = sphi 0, %s33
      %s37 = sphi 0, %s36
      %s53 = sphi 0, %s37
      %s57 = sphi 0, %s57
      %s59 = sphi 0, %s57
      %s60 = sphi 0, %s59
      %s74 = sphi 0, %s60
      %s78 = sphi 0, %s78
      %s80 = sphi 0, %s78
      %s81 = sphi 0, %s80
      %s95 = sphi 0, %s81
      %s99 = sphi 0, %s99
      %s101 = sphi 0, %s99
      %s102 = sphi 0, %s101
      %s116 = sphi 0, %s102
      %s120 = sphi 0, %s120
      %s122 = sphi 0, %s120
      %s123 = sphi 0, %s122
      %s137 = sphi 0, %s123
      %s141 = sphi 0, %s141
      %s143 = sphi 0, %s141
      %s144 = sphi 0, %s143
      %s158 = sphi 0, %s144
      %s162 = sphi 0, %s162
      %s164 = sphi 0, %s162
      %s165 = sphi 0, %s164
      %s179 = sphi 0, %s165
      %s183 = sphi 0, %s183
      %s185 = sphi 0, %s183
      %s186 = sphi 0, %s185
      %s200 = sphi 0, %s186
      %s204 = sphi 0, %s204
      %s206 = sphi 0, %s204
      %s207 = sphi 0, %s206
      %s221 = sphi 0, %s207
      %s225 = sphi 0, %s225
      %s227 = sphi 0, %s225
      %s228 = sphi 0, %s227
      %s242 = sphi 0, %s228
      %s248 = sphi 0, %s250
      %s251 = sphi 0, %s248
      %s252 = sphi 0, %s251
      %s268 = sphi 0, %s252
    $region4: #{tpu_custom_call.1} parent=1 // loop_header_branch
      %26 = sbr.rel (%p24) target = $region8
    $region5: #{tpu_custom_call.1} parent=1 // loop_body
      %s28 = ssub.s32 %s23, 1
      %s29 = ssub.s32 %s23, 2
      %s30 = sadd.s32 %s23, 1
      %s31 = ssub.s32 %s23, %s30
      %p32 = scmp.eq.s32.totalorder %s31, 0
      %s34 = sadd.s32 %s33, 1
      %s35 = scalar_select %p32, %s33, %s34
      %p38 = pneg %p32
      %p39 = scmp.eq.s32.totalorder %s23, 1
      %p40 = por %p38, %p39
      %p41 = scmp.ne.s32.totalorder %s33, %s36
      %p42 = scmp.eq.s32.totalorder %s23, 0
      %p43 = por %p41, %p42
      %p44 = scmp.ne.s32.totalorder %s33, %s36
      %p45 = scmp.eq.s32.totalorder %s28, 1
      %p46 = por %p44, %p45
      %p47 = scmp.ne.s32.totalorder %s36, %s37
      %p48 = scmp.eq.s32.totalorder %s28, 0
      %p49 = por %p47, %p48
      %p50 = scmp.ne.s32.totalorder %s36, %s37
      %p51 = scmp.eq.s32.totalorder %s29, 1
      %p52 = por %p50, %p51
      %p54 = scmp.ne.s32.totalorder %s37, %s53
      %p55 = scmp.eq.s32.totalorder %s29, 0
      %p56 = por %p54, %p55
      %s58 = sadd.s32 %s57, 1
      %p61 = scmp.eq.s32.totalorder %s23, 1
      %p62 = scmp.ne.s32.totalorder %s57, %s59
      %p63 = scmp.eq.s32.totalorder %s23, 0
      %p64 = por %p62, %p63
      %p65 = scmp.ne.s32.totalorder %s57, %s59
      %p66 = scmp.eq.s32.totalorder %s28, 1
      %p67 = por %p65, %p66
      %p68 = scmp.ne.s32.totalorder %s59, %s60
      %p69 = scmp.eq.s32.totalorder %s28, 0
      %p70 = por %p68, %p69
      %p71 = scmp.ne.s32.totalorder %s59, %s60
      %p72 = scmp.eq.s32.totalorder %s29, 1
      %p73 = por %p71, %p72
      %p75 = scmp.ne.s32.totalorder %s60, %s74
      %p76 = scmp.eq.s32.totalorder %s29, 0
      %p77 = por %p75, %p76
      %s79 = sadd.s32 %s78, 1
      %p82 = scmp.eq.s32.totalorder %s23, 1
      %p83 = scmp.ne.s32.totalorder %s78, %s80
      %p84 = scmp.eq.s32.totalorder %s23, 0
      %p85 = por %p83, %p84
      %p86 = scmp.ne.s32.totalorder %s78, %s80
      %p87 = scmp.eq.s32.totalorder %s28, 1
      %p88 = por %p86, %p87
      %p89 = scmp.ne.s32.totalorder %s80, %s81
      %p90 = scmp.eq.s32.totalorder %s28, 0
      %p91 = por %p89, %p90
      %p92 = scmp.ne.s32.totalorder %s80, %s81
      %p93 = scmp.eq.s32.totalorder %s29, 1
      %p94 = por %p92, %p93
      %p96 = scmp.ne.s32.totalorder %s81, %s95
      %p97 = scmp.eq.s32.totalorder %s29, 0
      %p98 = por %p96, %p97
      %s100 = sadd.s32 %s99, 1
      %p103 = scmp.eq.s32.totalorder %s23, 1
      %p104 = scmp.ne.s32.totalorder %s99, %s101
      %p105 = scmp.eq.s32.totalorder %s23, 0
      %p106 = por %p104, %p105
      %p107 = scmp.ne.s32.totalorder %s99, %s101
      %p108 = scmp.eq.s32.totalorder %s28, 1
      %p109 = por %p107, %p108
      %p110 = scmp.ne.s32.totalorder %s101, %s102
      %p111 = scmp.eq.s32.totalorder %s28, 0
      %p112 = por %p110, %p111
      %p113 = scmp.ne.s32.totalorder %s101, %s102
      %p114 = scmp.eq.s32.totalorder %s29, 1
      %p115 = por %p113, %p114
      %p117 = scmp.ne.s32.totalorder %s102, %s116
      %p118 = scmp.eq.s32.totalorder %s29, 0
      %p119 = por %p117, %p118
      %s121 = sadd.s32 %s120, 1
      %p124 = scmp.eq.s32.totalorder %s23, 1
      %p125 = scmp.ne.s32.totalorder %s120, %s122
      %p126 = scmp.eq.s32.totalorder %s23, 0
      %p127 = por %p125, %p126
      %p128 = scmp.ne.s32.totalorder %s120, %s122
      %p129 = scmp.eq.s32.totalorder %s28, 1
      %p130 = por %p128, %p129
      %p131 = scmp.ne.s32.totalorder %s122, %s123
      %p132 = scmp.eq.s32.totalorder %s28, 0
      %p133 = por %p131, %p132
      %p134 = scmp.ne.s32.totalorder %s122, %s123
      %p135 = scmp.eq.s32.totalorder %s29, 1
      %p136 = por %p134, %p135
      %p138 = scmp.ne.s32.totalorder %s123, %s137
      %p139 = scmp.eq.s32.totalorder %s29, 0
      %p140 = por %p138, %p139
      %s142 = sadd.s32 %s141, 1
      %p145 = scmp.eq.s32.totalorder %s23, 1
      %p146 = scmp.ne.s32.totalorder %s141, %s143
      %p147 = scmp.eq.s32.totalorder %s23, 0
      %p148 = por %p146, %p147
      %p149 = scmp.ne.s32.totalorder %s141, %s143
      %p150 = scmp.eq.s32.totalorder %s28, 1
      %p151 = por %p149, %p150
      %p152 = scmp.ne.s32.totalorder %s143, %s144
      %p153 = scmp.eq.s32.totalorder %s28, 0
      %p154 = por %p152, %p153
      %p155 = scmp.ne.s32.totalorder %s143, %s144
      %p156 = scmp.eq.s32.totalorder %s29, 1
      %p157 = por %p155, %p156
      %p159 = scmp.ne.s32.totalorder %s144, %s158
      %p160 = scmp.eq.s32.totalorder %s29, 0
      %p161 = por %p159, %p160
      %s163 = sadd.s32 %s162, 1
      %p166 = scmp.eq.s32.totalorder %s23, 1
      %p167 = scmp.ne.s32.totalorder %s162, %s164
      %p168 = scmp.eq.s32.totalorder %s23, 0
      %p169 = por %p167, %p168
      %p170 = scmp.ne.s32.totalorder %s162, %s164
      %p171 = scmp.eq.s32.totalorder %s28, 1
      %p172 = por %p170, %p171
      %p173 = scmp.ne.s32.totalorder %s164, %s165
      %p174 = scmp.eq.s32.totalorder %s28, 0
      %p175 = por %p173, %p174
      %p176 = scmp.ne.s32.totalorder %s164, %s165
      %p177 = scmp.eq.s32.totalorder %s29, 1
      %p178 = por %p176, %p177
      %p180 = scmp.ne.s32.totalorder %s165, %s179
      %p181 = scmp.eq.s32.totalorder %s29, 0
      %p182 = por %p180, %p181
      %s184 = sadd.s32 %s183, 1
      %p187 = scmp.eq.s32.totalorder %s23, 1
      %p188 = scmp.ne.s32.totalorder %s183, %s185
      %p189 = scmp.eq.s32.totalorder %s23, 0
      %p190 = por %p188, %p189
      %p191 = scmp.ne.s32.totalorder %s183, %s185
      %p192 = scmp.eq.s32.totalorder %s28, 1
      %p193 = por %p191, %p192
      %p194 = scmp.ne.s32.totalorder %s185, %s186
      %p195 = scmp.eq.s32.totalorder %s28, 0
      %p196 = por %p194, %p195
      %p197 = scmp.ne.s32.totalorder %s185, %s186
      %p198 = scmp.eq.s32.totalorder %s29, 1
      %p199 = por %p197, %p198
      %p201 = scmp.ne.s32.totalorder %s186, %s200
      %p202 = scmp.eq.s32.totalorder %s29, 0
      %p203 = por %p201, %p202
      %s205 = sadd.s32 %s204, 1
      %p208 = scmp.eq.s32.totalorder %s23, 1
      %p209 = scmp.ne.s32.totalorder %s204, %s206
      %p210 = scmp.eq.s32.totalorder %s23, 0
      %p211 = por %p209, %p210
      %p212 = scmp.ne.s32.totalorder %s204, %s206
      %p213 = scmp.eq.s32.totalorder %s28, 1
      %p214 = por %p212, %p213
      %p215 = scmp.ne.s32.totalorder %s206, %s207
      %p216 = scmp.eq.s32.totalorder %s28, 0
      %p217 = por %p215, %p216
      %p218 = scmp.ne.s32.totalorder %s206, %s207
      %p219 = scmp.eq.s32.totalorder %s29, 1
      %p220 = por %p218, %p219
      %p222 = scmp.ne.s32.totalorder %s207, %s221
      %p223 = scmp.eq.s32.totalorder %s29, 0
      %p224 = por %p222, %p223
      %s226 = sadd.s32 %s225, 1
      %p229 = scmp.eq.s32.totalorder %s23, 1
      %p230 = scmp.ne.s32.totalorder %s225, %s227
      %p231 = scmp.eq.s32.totalorder %s23, 0
      %p232 = por %p230, %p231
      %p233 = scmp.ne.s32.totalorder %s225, %s227
      %p234 = scmp.eq.s32.totalorder %s28, 1
      %p235 = por %p233, %p234
      %p236 = scmp.ne.s32.totalorder %s227, %s228
      %p237 = scmp.eq.s32.totalorder %s28, 0
      %p238 = por %p236, %p237
      %p239 = scmp.ne.s32.totalorder %s227, %s228
      %p240 = scmp.eq.s32.totalorder %s29, 1
      %p241 = por %p239, %p240
      %p243 = scmp.ne.s32.totalorder %s228, %s242
      %p244 = scmp.eq.s32.totalorder %s29, 0
      %p245 = por %p243, %p244
      %s246 = ssub.s32 %s23, %s30
      %p247 = scmp.eq.s32.totalorder %s246, 0
      %s249 = sadd.s32 %s248, 1
      %s250 = scalar_select %p247, %s248, %s249
      %p253 = pneg %p247
      %p254 = scmp.eq.s32.totalorder %s23, 1
      %p255 = por %p253, %p254
      %p256 = scmp.ne.s32.totalorder %s248, %s251
      %p257 = scmp.eq.s32.totalorder %s23, 0
      %p258 = por %p256, %p257
      %p259 = scmp.ne.s32.totalorder %s248, %s251
      %p260 = scmp.eq.s32.totalorder %s28, 1
      %p261 = por %p259, %p260
      %p262 = scmp.ne.s32.totalorder %s251, %s252
      %p263 = scmp.eq.s32.totalorder %s28, 0
      %p264 = por %p262, %p263
      %p265 = scmp.ne.s32.totalorder %s251, %s252
      %p266 = scmp.eq.s32.totalorder %s29, 1
      %p267 = por %p265, %p266
      %p269 = scmp.ne.s32.totalorder %s252, %s268
      %p270 = scmp.eq.s32.totalorder %s29, 0
      %p271 = por %p269, %p270
      %p272 = scmp.le.s32.totalorder 1, %s23
      %p273 = scmp.lt.s32.totalorder %s23, 3
      %p274 = pnand %p272, %p273
      %p275 = pneg %p274
      // Predicated region
      $region9: #{tpu_custom_call.1} parent=5 // pred_check
        _
      $region10: #{tpu_custom_call.1} parent=5 // pred_check_branch
        %277 = sbr.rel (%p274) target = $region12
      $region11: #{tpu_custom_call.1} parent=5 // pred_region
        %s278 = ssub.s32 %s23, 1
        // Predicated region
        $region13: #{tpu_custom_call.1} parent=11 // pred_check
          %p279 = pneg %p70
        $region14: #{tpu_custom_call.1} parent=11 // pred_check_branch
          %281 = sbr.rel (%p279) target = $region16
        $region15: #{tpu_custom_call.1} parent=11 // pred_region
          _
        $region16: #{tpu_custom_call.1} parent=11 // pred_fallthru
          _
        // Predicated region
        $region17: #{tpu_custom_call.1} parent=11 // pred_check
          %p282 = pneg %p91
        $region18: #{tpu_custom_call.1} parent=11 // pred_check_branch
          %284 = sbr.rel (%p282) target = $region20
        $region19: #{tpu_custom_call.1} parent=11 // pred_region
          _
        $region20: #{tpu_custom_call.1} parent=11 // pred_fallthru
          _
        // Predicated region
        $region21: #{tpu_custom_call.1} parent=11 // pred_check
          %p285 = pneg %p112
        $region22: #{tpu_custom_call.1} parent=11 // pred_check_branch
          %287 = sbr.rel (%p285) target = $region24
        $region23: #{tpu_custom_call.1} parent=11 // pred_region
          _
        $region24: #{tpu_custom_call.1} parent=11 // pred_fallthru
          _
        // Predicated region
        $region25: #{tpu_custom_call.1} parent=11 // pred_check
          %p288 = pneg %p133
        $region26: #{tpu_custom_call.1} parent=11 // pred_check_branch
          %290 = sbr.rel (%p288) target = $region28
        $region27: #{tpu_custom_call.1} parent=11 // pred_region
          _
        $region28: #{tpu_custom_call.1} parent=11 // pred_fallthru
          _
        // Predicated region
        $region29: #{tpu_custom_call.1} parent=11 // pred_check
          %p291 = pneg %p154
        $region30: #{tpu_custom_call.1} parent=11 // pred_check_branch
          %293 = sbr.rel (%p291) target = $region32
        $region31: #{tpu_custom_call.1} parent=11 // pred_region
          _
        $region32: #{tpu_custom_call.1} parent=11 // pred_fallthru
          _
        // Predicated region
        $region33: #{tpu_custom_call.1} parent=11 // pred_check
          %p294 = pneg %p175
        $region34: #{tpu_custom_call.1} parent=11 // pred_check_branch
          %296 = sbr.rel (%p294) target = $region36
        $region35: #{tpu_custom_call.1} parent=11 // pred_region
          _
        $region36: #{tpu_custom_call.1} parent=11 // pred_fallthru
          _
        // Predicated region
        $region37: #{tpu_custom_call.1} parent=11 // pred_check
          %p297 = pneg %p196
        $region38: #{tpu_custom_call.1} parent=11 // pred_check_branch
          %299 = sbr.rel (%p297) target = $region40
        $region39: #{tpu_custom_call.1} parent=11 // pred_region
          _
        $region40: #{tpu_custom_call.1} parent=11 // pred_fallthru
          _
        // Predicated region
        $region41: #{tpu_custom_call.1} parent=11 // pred_check
          %p300 = pneg %p217
        $region42: #{tpu_custom_call.1} parent=11 // pred_check_branch
          %302 = sbr.rel (%p300) target = $region44
        $region43: #{tpu_custom_call.1} parent=11 // pred_region
          _
        $region44: #{tpu_custom_call.1} parent=11 // pred_fallthru
          _
        // Predicated region
        $region45: #{tpu_custom_call.1} parent=11 // pred_check
          %p303 = pneg %p238
        $region46: #{tpu_custom_call.1} parent=11 // pred_check_branch
          %305 = sbr.rel (%p303) target = $region48
        $region47: #{tpu_custom_call.1} parent=11 // pred_region
          %s307 = ssub.s32 16, 16
          %308 = vsyncadd [#allocation5], %s307
          %s310 = sshll.u32 %s9, 4
          %s311 = int_to_ptr.vmem [resolvable:$true] %s310
          %313 = dma.vmem_to_smem %s311, 16, [#allocation6], [#allocation5]
        $region48: #{tpu_custom_call.1} parent=11 // pred_fallthru
          _
      $region12: #{tpu_custom_call.1} parent=5 // pred_fallthru
        _
      %p314 = scmp.lt.s32.totalorder %s23, 2
      // Predicated region
      $region49: #{tpu_custom_call.1} parent=5 // pred_check
        %p315 = pneg %p314
      $region50: #{tpu_custom_call.1} parent=5 // pred_check_branch
        %317 = sbr.rel (%p315) target = $region52
      $region51: #{tpu_custom_call.1} parent=5 // pred_region
        // Predicated region
        $region53: #{tpu_custom_call.1} parent=51 // pred_check
          %p318 = pneg %p43
        $region54: #{tpu_custom_call.1} parent=51 // pred_check_branch
          %320 = sbr.rel (%p318) target = $region56
        $region55: #{tpu_custom_call.1} parent=51 // pred_region
          %s321 = sand.u32 %s33, 1
          %s322 = scalar_lea.sflag [#allocation3], %s321
          %s323 = sand.u32 %s33, 1
          %s324 = smul.addr %s323, 64
          %s325 = scalar_lea.vmem [#allocation2], %s324
          %s327 = ssub.s32 1024, 1024
          %328 = vsyncadd %s322, %s327
          %s329 = smul.addr %s23, 8
          %s330 = smul.addr %s329, 128
          %s331 = scalar_lea.hbm %s0, %s330
          %s332 = sshll.u32 %s325, 4
          %s333 = int_to_ptr.vmem [resolvable:$true] %s332
          %338 = dma.hbm_to_vmem [thread:$0]  %s331, 1024, %s333, %s322, 256, 256, 16
        $region56: #{tpu_custom_call.1} parent=51 // pred_fallthru
          _
      $region52: #{tpu_custom_call.1} parent=5 // pred_fallthru
        _
      %p339 = scmp.le.s32.totalorder 1, %s23
      %p340 = scmp.lt.s32.totalorder %s23, 3
      %p341 = pnand %p339, %p340
      %p342 = pneg %p341
      // Predicated region
      $region57: #{tpu_custom_call.1} parent=5 // pred_check
        _
      $region58: #{tpu_custom_call.1} parent=5 // pred_check_branch
        %344 = sbr.rel (%p341) target = $region60
      $region59: #{tpu_custom_call.1} parent=5 // pred_region
        %s345 = ssub.s32 %s23, 1
        %s346 = sand.u32 %s36, 1
        %s347 = scalar_lea.sflag [#allocation3], %s346
        %s348 = sand.u32 %s36, 1
        %s349 = smul.addr %s348, 64
        %s350 = scalar_lea.vmem [#allocation2], %s349
        // Predicated region
        $region61: #{tpu_custom_call.1} parent=59 // pred_check
          %p351 = pneg %p49
        $region62: #{tpu_custom_call.1} parent=59 // pred_check_branch
          %353 = sbr.rel (%p351) target = $region64
        $region63: #{tpu_custom_call.1} parent=59 // pred_region
          %354 = dma.done %s347, 1024
        $region64: #{tpu_custom_call.1} parent=59 // pred_fallthru
          _
        // Predicated region
        $region65: #{tpu_custom_call.1} parent=59 // pred_check
          %p355 = pneg %p238
        $region66: #{tpu_custom_call.1} parent=59 // pred_check_branch
          %357 = sbr.rel (%p355) target = $region68
        $region67: #{tpu_custom_call.1} parent=59 // pred_region
          %358 = dma.done [#allocation5], 16
        $region68: #{tpu_custom_call.1} parent=59 // pred_fallthru
          _
        %359 = sfence
        %s360 = sand.u32 %s36, 1
        %s361 = scalar_lea.sflag [#allocation3], %s360
        %s362 = sand.u32 %s36, 1
        %s363 = smul.addr %s362, 64
        %s364 = scalar_lea.vmem [#allocation2], %s363
        %p365 = pneg %p49
        %p366 = pneg %p46
        %p367 = pneg %p70
        %p368 = pneg %p67
        %p369 = pneg %p91
        %p370 = pneg %p88
        %p371 = pneg %p112
        %p372 = pneg %p109
        %p373 = pneg %p133
        %p374 = pneg %p130
        %p375 = pneg %p154
        %p376 = pneg %p151
        %p377 = pneg %p175
        %p378 = pneg %p172
        %p379 = pneg %p196
        %p380 = pneg %p193
        %p381 = pneg %p217
        %p382 = pneg %p214
        %p383 = pneg %p238
        %p384 = pneg %p235
        %p385 = pneg %p264
        %p386 = pneg %p261
        %s387 = sand.u32 %s251, 1
        %s388 = scalar_lea.sflag [#allocation4], %s387
        %s389 = sand.u32 %s251, 1
        %s390 = smul.addr %s389, 64
        %s391 = scalar_lea.vmem [#allocation7], %s390
        %v392 = vld [vmem:[%s350] sm:$0xff]
        %v393 = vld [vmem:[%s350 + $0x8] sm:$0xff]
        %v394 = vld [vmem:[%s350 + $0x10] sm:$0xff]
        %v395 = vld [vmem:[%s350 + $0x18] sm:$0xff]
        %v396 = vld [vmem:[%s350 + $0x20] sm:$0xff]
        %v397 = vld [vmem:[%s350 + $0x28] sm:$0xff]
        %v398 = vld [vmem:[%s350 + $0x30] sm:$0xff]
        %v399 = vld [vmem:[%s350 + $0x38] sm:$0xff]
        %v400 = vld [vmem:[%s1] sm:$0x1]
        %v401 = vld [vmem:[%s2] sm:$0x1]
        %v402 = vld [vmem:[%s3] sm:$0x1]
        %v403 = vadd.f32 %v392, %v393
        %404 = vadd.xlane.f32.xlu0 %v403
        %v405 = vpop.xlane.xlu0 %404
        %v406 = vadd.f32 %v394, %v395
        %407 = vadd.xlane.f32.xlu0 %v406
        %v408 = vpop.xlane.xlu0 %407
        %v409 = vadd.f32 %v396, %v397
        %410 = vadd.xlane.f32.xlu0 %v409
        %v411 = vpop.xlane.xlu0 %410
        %v412 = vadd.f32 %v398, %v399
        %413 = vadd.xlane.f32.xlu0 %v412
        %v414 = vpop.xlane.xlu0 %413
        %v415 = vmul.f32 %v392, %v392
        %v416 = vmul.f32 %v393, %v393
        %v417 = vmul.f32 %v394, %v394
        %v418 = vmul.f32 %v395, %v395
        %v419 = vmul.f32 %v396, %v396
        %v420 = vmul.f32 %v397, %v397
        %v421 = vmul.f32 %v398, %v398
        %v422 = vmul.f32 %v399, %v399
        %v423 = vadd.f32 %v415, %v416
        %424 = vadd.xlane.f32.xlu0 %v423
        %v425 = vpop.xlane.xlu0 %424
        %v426 = vadd.f32 %v417, %v418
        %427 = vadd.xlane.f32.xlu0 %v426
        %v428 = vpop.xlane.xlu0 %427
        %v429 = vadd.f32 %v419, %v420
        %430 = vadd.xlane.f32.xlu0 %v429
        %v431 = vpop.xlane.xlu0 %430
        %v432 = vadd.f32 %v421, %v422
        %433 = vadd.xlane.f32.xlu0 %v432
        %v434 = vpop.xlane.xlu0 %433
        %v435 = vld [vmem:[%s4] sm:$0xff]
        %v436 = vld [vmem:[%s4 + $0x8] sm:$0xff]
        %v437 = vld [vmem:[%s4 + $0x10] sm:$0xff]
        %v438 = vld [vmem:[%s4 + $0x18] sm:$0xff]
        %v443 = vlaneseq
        %v444 = vand.u32 %v443, 127
        %v445 = vlaneseq
        %v446 = vshrl.u32 %v445, 7
        %v447 = vsub.s32 %v444, %v446
        %v448 = vrot.slane %v405, %v447
        %v449 = vadd.s32 %v444, 4294967288
        %v450 = vlaneseq
        %v451 = vshrl.u32 %v450, 7
        %v452 = vsub.s32 %v449, %v451
        %v453 = vrot.slane %v408, %v452
        %vm454 = vcmask 130112
        %v455 = vsel %vm454, %v453, %v448
        %v456 = vadd.s32 %v444, 4294967280
        %v457 = vlaneseq
        %v458 = vshrl.u32 %v457, 7
        %v459 = vsub.s32 %v456, %v458
        %v460 = vrot.slane %v411, %v459
        %vm461 = vcmask 195712
        %v462 = vsel %vm461, %v460, %v455
        %v463 = vadd.s32 %v444, 4294967272
        %v464 = vlaneseq
        %v465 = vshrl.u32 %v464, 7
        %v466 = vsub.s32 %v463, %v465
        %v467 = vrot.slane %v414, %v466
        %vm468 = vcmask 261312
        %v469 = vsel %vm468, %v467, %v462
        %vm470 = vcmask 261120
        %v471 = vsel %vm470, %v469, 0
        %473 = vmatprep.subr.mxu0 0.0
        %474 = vmatpush1.msra.mxu0 %v435
        %475 = vmatprep.subr.mxu0 0.0
        %476 = vmatpush1.msra.mxu0 %v436
        %477 = vmatprep.subr.mxu0 0.0
        %478 = vmatpush1.msra.mxu0 %v437
        %479 = vmatprep.subr.mxu0 0.0
        %480 = vmatpush1.msra.mxu0 %v438
        %481 = vmatprep.subr.mxu0 0.0
        %482 = vmatpush1.msra.mxu0 0.0
        %483 = vmatprep.subr.mxu0 0.0
        %484 = vmatpush1.msra.mxu0 0.0
        %485 = vmatprep.subr.mxu0 0.0
        %486 = vmatpush1.msra.mxu0 0.0
        %487 = vmatprep.subr.mxu0 0.0
        %488 = vmatpush1.msra.mxu0 0.0
        %489 = vmatprep.subr.mxu0 0.0
        %490 = vmatpush1.msra.mxu0 0.0
        %491 = vmatprep.subr.mxu0 0.0
        %492 = vmatpush1.msra.mxu0 0.0
        %493 = vmatprep.subr.mxu0 0.0
        %494 = vmatpush1.msra.mxu0 0.0
        %495 = vmatprep.subr.mxu0 0.0
        %496 = vmatpush1.msra.mxu0 0.0
        %497 = vmatprep.subr.mxu0 0.0
        %498 = vmatpush1.msra.mxu0 0.0
        %499 = vmatprep.subr.mxu0 0.0
        %500 = vmatpush1.msra.mxu0 0.0
        %501 = vmatprep.subr.mxu0 0.0
        %502 = vmatpush1.msra.mxu0 0.0
        %503 = vmatprep.subr.mxu0 0.0
        %504 = vmatpush1.msra.mxu0 0.0
        %505 = vmatprep.subr.mxu0 0.0
        %506 = vmatpush1.msra.mxu0 0.0
        %507 = vmatprep.subr.mxu0 0.0
        %508 = vmatpush1.msra.mxu0 0.0
        %509 = vmatprep.subr.mxu0 0.0
        %510 = vmatpush1.msra.mxu0 0.0
        %511 = vmatprep.subr.mxu0 0.0
        %512 = vmatpush1.msra.mxu0 0.0
        %513 = vmatprep.subr.mxu0 0.0
        %514 = vmatpush1.msra.mxu0 0.0
        %515 = vmatprep.subr.mxu0 0.0
        %516 = vmatpush1.msra.mxu0 0.0
        %517 = vmatprep.subr.mxu0 0.0
        %518 = vmatpush1.msra.mxu0 0.0
        %519 = vmatprep.subr.mxu0 0.0
        %520 = vmatpush1.msra.mxu0 0.0
        %521 = vmatprep.subr.mxu0 0.0
        %522 = vmatpush1.msra.mxu0 0.0
        %523 = vmatprep.subr.mxu0 0.0
        %524 = vmatpush1.msra.mxu0 0.0
        %525 = vmatprep.subr.mxu0 0.0
        %526 = vmatpush1.msra.mxu0 0.0
        %527 = vmatprep.subr.mxu0 0.0
        %528 = vmatpush1.msra.mxu0 0.0
        %529 = vmatprep.subr.mxu0 0.0
        %530 = vmatpush1.msra.mxu0 0.0
        %531 = vmatprep.subr.mxu0 0.0
        %532 = vmatpush1.msra.mxu0 0.0
        %533 = vmatprep.subr.mxu0 0.0
        %534 = vmatpush1.msra.mxu0 0.0
        %535 = vmatprep.subr.mxu0 0.0
        %536 = vmatpush1.msra.mxu0 0.0
        %537 = vmatprep.mubr.f32.mxu0 0.0
        %538 = vmatmul.mubr.f32.gmra.mrb[0].mxu0 %v471
        %v539 = vpop.f32.mrb[0].mxu0
        %v540 = vadd.f32 0.0, %v539
        %v541 = vpop.f32.mrb[0].mxu0
        %542 = vdwg.mxu0
        %v547 = vlaneseq
        %v548 = vshrl.u32 %v547, 7
        %v549 = vsub.s32 %v444, %v548
        %v550 = vrot.slane %v425, %v549
        %v551 = vlaneseq
        %v552 = vshrl.u32 %v551, 7
        %v553 = vsub.s32 %v449, %v552
        %v554 = vrot.slane %v428, %v553
        %v555 = vsel %vm454, %v554, %v550
        %v556 = vlaneseq
        %v557 = vshrl.u32 %v556, 7
        %v558 = vsub.s32 %v456, %v557
        %v559 = vrot.slane %v431, %v558
        %v560 = vsel %vm461, %v559, %v555
        %v561 = vlaneseq
        %v562 = vshrl.u32 %v561, 7
        %v563 = vsub.s32 %v463, %v562
        %v564 = vrot.slane %v434, %v563
        %v565 = vsel %vm468, %v564, %v560
        %v566 = vsel %vm470, %v565, 0
        %568 = vmatprep.subr.mxu0 0.0
        %569 = vmatpush1.msra.mxu0 %v435
        %570 = vmatprep.subr.mxu0 0.0
        %571 = vmatpush1.msra.mxu0 %v436
        %572 = vmatprep.subr.mxu0 0.0
        %573 = vmatpush1.msra.mxu0 %v437
        %574 = vmatprep.subr.mxu0 0.0
        %575 = vmatpush1.msra.mxu0 %v438
        %576 = vmatprep.subr.mxu0 0.0
        %577 = vmatpush1.msra.mxu0 0.0
        %578 = vmatprep.subr.mxu0 0.0
        %579 = vmatpush1.msra.mxu0 0.0
        %580 = vmatprep.subr.mxu0 0.0
        %581 = vmatpush1.msra.mxu0 0.0
        %582 = vmatprep.subr.mxu0 0.0
        %583 = vmatpush1.msra.mxu0 0.0
        %584 = vmatprep.subr.mxu0 0.0
        %585 = vmatpush1.msra.mxu0 0.0
        %586 = vmatprep.subr.mxu0 0.0
        %587 = vmatpush1.msra.mxu0 0.0
        %588 = vmatprep.subr.mxu0 0.0
        %589 = vmatpush1.msra.mxu0 0.0
        %590 = vmatprep.subr.mxu0 0.0
        %591 = vmatpush1.msra.mxu0 0.0
        %592 = vmatprep.subr.mxu0 0.0
        %593 = vmatpush1.msra.mxu0 0.0
        %594 = vmatprep.subr.mxu0 0.0
        %595 = vmatpush1.msra.mxu0 0.0
        %596 = vmatprep.subr.mxu0 0.0
        %597 = vmatpush1.msra.mxu0 0.0
        %598 = vmatprep.subr.mxu0 0.0
        %599 = vmatpush1.msra.mxu0 0.0
        %600 = vmatprep.subr.mxu0 0.0
        %601 = vmatpush1.msra.mxu0 0.0
        %602 = vmatprep.subr.mxu0 0.0
        %603 = vmatpush1.msra.mxu0 0.0
        %604 = vmatprep.subr.mxu0 0.0
        %605 = vmatpush1.msra.mxu0 0.0
        %606 = vmatprep.subr.mxu0 0.0
        %607 = vmatpush1.msra.mxu0 0.0
        %608 = vmatprep.subr.mxu0 0.0
        %609 = vmatpush1.msra.mxu0 0.0
        %610 = vmatprep.subr.mxu0 0.0
        %611 = vmatpush1.msra.mxu0 0.0
        %612 = vmatprep.subr.mxu0 0.0
        %613 = vmatpush1.msra.mxu0 0.0
        %614 = vmatprep.subr.mxu0 0.0
        %615 = vmatpush1.msra.mxu0 0.0
        %616 = vmatprep.subr.mxu0 0.0
        %617 = vmatpush1.msra.mxu0 0.0
        %618 = vmatprep.subr.mxu0 0.0
        %619 = vmatpush1.msra.mxu0 0.0
        %620 = vmatprep.subr.mxu0 0.0
        %621 = vmatpush1.msra.mxu0 0.0
        %622 = vmatprep.subr.mxu0 0.0
        %623 = vmatpush1.msra.mxu0 0.0
        %624 = vmatprep.subr.mxu0 0.0
        %625 = vmatpush1.msra.mxu0 0.0
        %626 = vmatprep.subr.mxu0 0.0
        %627 = vmatpush1.msra.mxu0 0.0
        %628 = vmatprep.subr.mxu0 0.0
        %629 = vmatpush1.msra.mxu0 0.0
        %630 = vmatprep.subr.mxu0 0.0
        %631 = vmatpush1.msra.mxu0 0.0
        %632 = vmatprep.mubr.f32.mxu0 0.0
        %633 = vmatmul.mubr.f32.gmra.mrb[0].mxu0 %v566
        %v634 = vpop.f32.mrb[0].mxu0
        %v635 = vadd.f32 0.0, %v634
        %v636 = vpop.f32.mrb[0].mxu0
        %637 = vdwg.mxu0
        %v638 = vmul.f32 %v540, %v540
        %v639 = vsub.f32 %v635, %v638
        %v640 = vmax.f32 %v639, 0.0
        %v641 = vadd.f32 %v640, 1e-05
        %v642 = vrsqrt.pop %v641
        %v643 = vmul.f32 %v405, 0.00390625
        %v644 = vmul.f32 %v408, 0.00390625
        %v645 = vmul.f32 %v411, 0.00390625
        %v646 = vmul.f32 %v414, 0.00390625
        %v647 = vld [vmem:[%s5] sm:$0xff]
        %v648 = vld [vmem:[%s5 + $0x8] sm:$0xff]
        %v649 = vld [vmem:[%s5 + $0x10] sm:$0xff]
        %v650 = vld [vmem:[%s5 + $0x18] sm:$0xff]
        %v651 = vld [vmem:[%s6] sm:$0x1]
        %v656 = vlaneseq
        %v657 = vshrl.u32 %v656, 7
        %v658 = vsub.s32 %v444, %v657
        %v659 = vrot.slane %v643, %v658
        %v660 = vlaneseq
        %v661 = vshrl.u32 %v660, 7
        %v662 = vsub.s32 %v449, %v661
        %v663 = vrot.slane %v644, %v662
        %v664 = vsel %vm454, %v663, %v659
        %v665 = vlaneseq
        %v666 = vshrl.u32 %v665, 7
        %v667 = vsub.s32 %v456, %v666
        %v668 = vrot.slane %v645, %v667
        %v669 = vsel %vm461, %v668, %v664
        %v670 = vlaneseq
        %v671 = vshrl.u32 %v670, 7
        %v672 = vsub.s32 %v463, %v671
        %v673 = vrot.slane %v646, %v672
        %v674 = vsel %vm468, %v673, %v669
        %v675 = vsel %vm470, %v674, 0
        %677 = vmatprep.subr.mxu0 0.0
        %678 = vmatpush1.msra.mxu0 %v647
        %679 = vmatprep.subr.mxu0 0.0
        %680 = vmatpush1.msra.mxu0 %v648
        %681 = vmatprep.subr.mxu0 0.0
        %682 = vmatpush1.msra.mxu0 %v649
        %683 = vmatprep.subr.mxu0 0.0
        %684 = vmatpush1.msra.mxu0 %v650
        %685 = vmatprep.subr.mxu0 0.0
        %686 = vmatpush1.msra.mxu0 0.0
        %687 = vmatprep.subr.mxu0 0.0
        %688 = vmatpush1.msra.mxu0 0.0
        %689 = vmatprep.subr.mxu0 0.0
        %690 = vmatpush1.msra.mxu0 0.0
        %691 = vmatprep.subr.mxu0 0.0
        %692 = vmatpush1.msra.mxu0 0.0
        %693 = vmatprep.subr.mxu0 0.0
        %694 = vmatpush1.msra.mxu0 0.0
        %695 = vmatprep.subr.mxu0 0.0
        %696 = vmatpush1.msra.mxu0 0.0
        %697 = vmatprep.subr.mxu0 0.0
        %698 = vmatpush1.msra.mxu0 0.0
        %699 = vmatprep.subr.mxu0 0.0
        %700 = vmatpush1.msra.mxu0 0.0
        %701 = vmatprep.subr.mxu0 0.0
        %702 = vmatpush1.msra.mxu0 0.0
        %703 = vmatprep.subr.mxu0 0.0
        %704 = vmatpush1.msra.mxu0 0.0
        %705 = vmatprep.subr.mxu0 0.0
        %706 = vmatpush1.msra.mxu0 0.0
        %707 = vmatprep.subr.mxu0 0.0
        %708 = vmatpush1.msra.mxu0 0.0
        %709 = vmatprep.subr.mxu0 0.0
        %710 = vmatpush1.msra.mxu0 0.0
        %711 = vmatprep.subr.mxu0 0.0
        %712 = vmatpush1.msra.mxu0 0.0
        %713 = vmatprep.subr.mxu0 0.0
        %714 = vmatpush1.msra.mxu0 0.0
        %715 = vmatprep.subr.mxu0 0.0
        %716 = vmatpush1.msra.mxu0 0.0
        %717 = vmatprep.subr.mxu0 0.0
        %718 = vmatpush1.msra.mxu0 0.0
        %719 = vmatprep.subr.mxu0 0.0
        %720 = vmatpush1.msra.mxu0 0.0
        %721 = vmatprep.subr.mxu0 0.0
        %722 = vmatpush1.msra.mxu0 0.0
        %723 = vmatprep.subr.mxu0 0.0
        %724 = vmatpush1.msra.mxu0 0.0
        %725 = vmatprep.subr.mxu0 0.0
        %726 = vmatpush1.msra.mxu0 0.0
        %727 = vmatprep.subr.mxu0 0.0
        %728 = vmatpush1.msra.mxu0 0.0
        %729 = vmatprep.subr.mxu0 0.0
        %730 = vmatpush1.msra.mxu0 0.0
        %731 = vmatprep.subr.mxu0 0.0
        %732 = vmatpush1.msra.mxu0 0.0
        %733 = vmatprep.subr.mxu0 0.0
        %734 = vmatpush1.msra.mxu0 0.0
        %735 = vmatprep.subr.mxu0 0.0
        %736 = vmatpush1.msra.mxu0 0.0
        %737 = vmatprep.subr.mxu0 0.0
        %738 = vmatpush1.msra.mxu0 0.0
        %739 = vmatprep.subr.mxu0 0.0
        %740 = vmatpush1.msra.mxu0 0.0
        %741 = vmatprep.mubr.f32.mxu0 0.0
        %742 = vmatmul.mubr.f32.gmra.mrb[0].mxu0 %v675
        %v743 = vpop.f32.mrb[0].mxu0
        %v744 = vadd.f32 %v651, %v743
        %v745 = vpop.f32.mrb[0].mxu0
        %746 = vdwg.mxu0
        %v747 = vmax.f32 %v744, 0.0
        %v748 = vld [vmem:[%s7] sm:$0xff]
        %v749 = vld [vmem:[%s8] sm:$0x1]
        %vm750 = vcmask 64512
        %v752 = vsel %vm750, %v747, 0
        %754 = vmatprep.subr.mxu0 0.0
        %755 = vmatpush1.msra.mxu0 %v748
        %756 = vmatprep.subr.mxu0 0.0
        %757 = vmatpush1.msra.mxu0 0.0
        %758 = vmatprep.subr.mxu0 0.0
        %759 = vmatpush1.msra.mxu0 0.0
        %760 = vmatprep.subr.mxu0 0.0
        %761 = vmatpush1.msra.mxu0 0.0
        %762 = vmatprep.subr.mxu0 0.0
        %763 = vmatpush1.msra.mxu0 0.0
        %764 = vmatprep.subr.mxu0 0.0
        %765 = vmatpush1.msra.mxu0 0.0
        %766 = vmatprep.subr.mxu0 0.0
        %767 = vmatpush1.msra.mxu0 0.0
        %768 = vmatprep.subr.mxu0 0.0
        %769 = vmatpush1.msra.mxu0 0.0
        %770 = vmatprep.subr.mxu0 0.0
        %771 = vmatpush1.msra.mxu0 0.0
        %772 = vmatprep.subr.mxu0 0.0
        %773 = vmatpush1.msra.mxu0 0.0
        %774 = vmatprep.subr.mxu0 0.0
        %775 = vmatpush1.msra.mxu0 0.0
        %776 = vmatprep.subr.mxu0 0.0
        %777 = vmatpush1.msra.mxu0 0.0
        %778 = vmatprep.subr.mxu0 0.0
        %779 = vmatpush1.msra.mxu0 0.0
        %780 = vmatprep.subr.mxu0 0.0
        %781 = vmatpush1.msra.mxu0 0.0
        %782 = vmatprep.subr.mxu0 0.0
        %783 = vmatpush1.msra.mxu0 0.0
        %784 = vmatprep.subr.mxu0 0.0
        %785 = vmatpush1.msra.mxu0 0.0
        %786 = vmatprep.subr.mxu0 0.0
        %787 = vmatpush1.msra.mxu0 0.0
        %788 = vmatprep.subr.mxu0 0.0
        %789 = vmatpush1.msra.mxu0 0.0
        %790 = vmatprep.subr.mxu0 0.0
        %791 = vmatpush1.msra.mxu0 0.0
        %792 = vmatprep.subr.mxu0 0.0
        %793 = vmatpush1.msra.mxu0 0.0
        %794 = vmatprep.subr.mxu0 0.0
        %795 = vmatpush1.msra.mxu0 0.0
        %796 = vmatprep.subr.mxu0 0.0
        %797 = vmatpush1.msra.mxu0 0.0
        %798 = vmatprep.subr.mxu0 0.0
        %799 = vmatpush1.msra.mxu0 0.0
        %800 = vmatprep.subr.mxu0 0.0
        %801 = vmatpush1.msra.mxu0 0.0
        %802 = vmatprep.subr.mxu0 0.0
        %803 = vmatpush1.msra.mxu0 0.0
        %804 = vmatprep.subr.mxu0 0.0
        %805 = vmatpush1.msra.mxu0 0.0
        %806 = vmatprep.subr.mxu0 0.0
        %807 = vmatpush1.msra.mxu0 0.0
        %808 = vmatprep.subr.mxu0 0.0
        %809 = vmatpush1.msra.mxu0 0.0
        %810 = vmatprep.subr.mxu0 0.0
        %811 = vmatpush1.msra.mxu0 0.0
        %812 = vmatprep.subr.mxu0 0.0
        %813 = vmatpush1.msra.mxu0 0.0
        %814 = vmatprep.subr.mxu0 0.0
        %815 = vmatpush1.msra.mxu0 0.0
        %816 = vmatprep.subr.mxu0 0.0
        %817 = vmatpush1.msra.mxu0 0.0
        %818 = vmatprep.mubr.f32.mxu0 0.0
        %819 = vmatmul.mubr.f32.gmra.mrb[0].mxu0 %v752
        %v820 = vpop.f32.mrb[0].mxu0
        %v821 = vadd.f32 %v749, %v820
        %v822 = vpop.f32.mrb[0].mxu0
        %823 = vdwg.mxu0
        %v824 = vxor.u32 %v821, 2147483648
        %v825 = vmul.f32 %v824, 1.442695
        %v826 = vpow.pop %v825
        %v827 = vadd.f32 %v826, 1.0
        %v828 = vrcp.pop %v827
        %v829 = vmul.f32 1.0, %v828
        %v830 = vmul.f32 %v642, %v400
        %v831 = vmul.f32 %v540, %v830
        %v832 = vsub.f32 %v401, %v831
        %v833 = vmul.f32 %v402, %v829
        %v834 = vmul.f32 %v830, %v833
        %v835 = vmul.f32 %v832, %v833
        %s836 = sld [smem:[#allocation6]]
        %s837 = sld [smem:[#allocation6 + $0x1]]
        %s838 = sld [smem:[#allocation6 + $0x2]]
        %s839 = sld [smem:[#allocation6 + $0x3]]
        %s840 = sld [smem:[#allocation6 + $0x4]]
        %v841 = vlaneseq
        %v842 = vshrl.u32 %v841, 7
        %v843 = vsub.s32 0, %v842
        %v844 = vrot.slane %v834, %v843
        %846 = vbcast.lane.b32.xlu0 %v844, 256
        %v847 = vpop.permute.xlu0 %846
        %s849 = sor.u32 256, 8
        %850 = vbcast.lane.b32.xlu0 %v844, %s849
        %v851 = vpop.permute.xlu0 %850
        %v852 = vmul.f32 %v392, %v847
        %v853 = vmul.f32 %v393, %v847
        %v854 = vmul.f32 %v394, %v851
        %v855 = vmul.f32 %v395, %v851
        %v856 = vlaneseq
        %v857 = vshrl.u32 %v856, 7
        %v858 = vsub.s32 0, %v857
        %v859 = vrot.slane %v835, %v858
        %861 = vbcast.lane.b32.xlu0 %v859, 256
        %v862 = vpop.permute.xlu0 %861
        %s864 = sor.u32 256, 8
        %865 = vbcast.lane.b32.xlu0 %v859, %s864
        %v866 = vpop.permute.xlu0 %865
        %v867 = vadd.f32 %v852, %v862
        %v868 = vadd.f32 %v853, %v862
        %v869 = vadd.f32 %v854, %v866
        %v870 = vadd.f32 %v855, %v866
        %v871 = vxor.u32 %v867, 2147483648
        %v872 = vxor.u32 %v868, 2147483648
        %v873 = vxor.u32 %v869, 2147483648
        %v874 = vxor.u32 %v870, 2147483648
        %v875 = vmul.f32 %v871, 1.442695
        %v876 = vpow.pop %v875
        %v877 = vmul.f32 %v872, 1.442695
        %v878 = vpow.pop %v877
        %v879 = vmul.f32 %v873, 1.442695
        %v880 = vpow.pop %v879
        %v881 = vmul.f32 %v874, 1.442695
        %v882 = vpow.pop %v881
        %v883 = vadd.f32 %v876, 1.0
        %v884 = vadd.f32 %v878, 1.0
        %v885 = vadd.f32 %v880, 1.0
        %v886 = vadd.f32 %v882, 1.0
        %v887 = vrcp.pop %v883
        %v888 = vmul.f32 1.0, %v887
        %v889 = vrcp.pop %v884
        %v890 = vmul.f32 1.0, %v889
        %v891 = vrcp.pop %v885
        %v892 = vmul.f32 1.0, %v891
        %v893 = vrcp.pop %v886
        %v894 = vmul.f32 1.0, %v893
        %s896 = sor.u32 256, 16
        %897 = vbcast.lane.b32.xlu0 %v844, %s896
        %v898 = vpop.permute.xlu0 %897
        %s900 = sor.u32 256, 24
        %901 = vbcast.lane.b32.xlu0 %v844, %s900
        %v902 = vpop.permute.xlu0 %901
        %v903 = vmul.f32 %v396, %v898
        %v904 = vmul.f32 %v397, %v898
        %v905 = vmul.f32 %v398, %v902
        %v906 = vmul.f32 %v399, %v902
        %s908 = sor.u32 256, 16
        %909 = vbcast.lane.b32.xlu0 %v859, %s908
        %v910 = vpop.permute.xlu0 %909
        %s912 = sor.u32 256, 24
        %913 = vbcast.lane.b32.xlu0 %v859, %s912
        %v914 = vpop.permute.xlu0 %913
        %v915 = vadd.f32 %v903, %v910
        %v916 = vadd.f32 %v904, %v910
        %v917 = vadd.f32 %v905, %v914
        %v918 = vadd.f32 %v906, %v914
        %v919 = vxor.u32 %v915, 2147483648
        %v920 = vxor.u32 %v916, 2147483648
        %v921 = vxor.u32 %v917, 2147483648
        %v922 = vxor.u32 %v918, 2147483648
        %v923 = vmul.f32 %v919, 1.442695
        %v924 = vpow.pop %v923
        %v925 = vmul.f32 %v920, 1.442695
        %v926 = vpow.pop %v925
        %v927 = vmul.f32 %v921, 1.442695
        %v928 = vpow.pop %v927
        %v929 = vmul.f32 %v922, 1.442695
        %v930 = vpow.pop %v929
        %v931 = vadd.f32 %v924, 1.0
        %v932 = vadd.f32 %v926, 1.0
        %v933 = vadd.f32 %v928, 1.0
        %v934 = vadd.f32 %v930, 1.0
        %v935 = vrcp.pop %v931
        %v936 = vmul.f32 1.0, %v935
        %v937 = vrcp.pop %v932
        %v938 = vmul.f32 1.0, %v937
        %v939 = vrcp.pop %v933
        %v940 = vmul.f32 1.0, %v939
        %v941 = vrcp.pop %v934
        %v942 = vmul.f32 1.0, %v941
        %v943 = vstv %s836
        %vm944 = vcmp.gt.f32.partialorder %v888, %v943
        %vm945 = vcmp.gt.f32.partialorder %v890, %v943
        %vm946 = vcmp.gt.f32.partialorder %v892, %v943
        %vm947 = vcmp.gt.f32.partialorder %v894, %v943
        %vm948 = vcmp.gt.f32.partialorder %v936, %v943
        %vm949 = vcmp.gt.f32.partialorder %v938, %v943
        %vm950 = vcmp.gt.f32.partialorder %v940, %v943
        %vm951 = vcmp.gt.f32.partialorder %v942, %v943
        %v952 = vmul.f32 %v888, %v392
        %v953 = vmul.f32 %v890, %v393
        %v954 = vmul.f32 %v892, %v394
        %v955 = vmul.f32 %v894, %v395
        %v956 = vmul.f32 %v936, %v396
        %v957 = vmul.f32 %v938, %v397
        %v958 = vmul.f32 %v940, %v398
        %v959 = vmul.f32 %v942, %v399
        %v960 = vsel %vm944, %v392, %v952
        %v961 = vsel %vm945, %v393, %v953
        %v962 = vsel %vm946, %v394, %v954
        %v963 = vsel %vm947, %v395, %v955
        %v964 = vstv %s837
        %v965 = vmul.f32 %v964, %v960
        %v966 = vmul.f32 %v964, %v961
        %v967 = vmul.f32 %v964, %v962
        %v968 = vmul.f32 %v964, %v963
        %v969 = vsel %vm948, 0.0, %v956
        %v970 = vsel %vm949, 0.0, %v957
        %v971 = vsel %vm950, 0.0, %v958
        %v972 = vsel %vm951, 0.0, %v959
        %v973 = vstv %s838
        %v974 = vmul.f32 %v973, %v969
        %v975 = vmul.f32 %v973, %v970
        %v976 = vmul.f32 %v973, %v971
        %v977 = vmul.f32 %v973, %v972
        %v978 = vadd.f32 %v965, %v974
        %v979 = vadd.f32 %v966, %v975
        %v980 = vadd.f32 %v967, %v976
        %v981 = vadd.f32 %v968, %v977
        %982 = vst [vmem:[%s391] sm:$0xff] %v978
        %983 = vst [vmem:[%s391 + $0x8] sm:$0xff] %v979
        %984 = vst [vmem:[%s391 + $0x10] sm:$0xff] %v980
        %985 = vst [vmem:[%s391 + $0x18] sm:$0xff] %v981
        %v986 = vsel %vm948, %v396, %v956
        %v987 = vsel %vm949, %v397, %v957
        %v988 = vsel %vm950, %v398, %v958
        %v989 = vsel %vm951, %v399, %v959
        %v990 = vstv %s839
        %v991 = vmul.f32 %v990, %v986
        %v992 = vmul.f32 %v990, %v987
        %v993 = vmul.f32 %v990, %v988
        %v994 = vmul.f32 %v990, %v989
        %v995 = vsel %vm944, 0.0, %v952
        %v996 = vsel %vm945, 0.0, %v953
        %v997 = vsel %vm946, 0.0, %v954
        %v998 = vsel %vm947, 0.0, %v955
        %v999 = vstv %s840
        %v1000 = vmul.f32 %v999, %v995
        %v1001 = vmul.f32 %v999, %v996
        %v1002 = vmul.f32 %v999, %v997
        %v1003 = vmul.f32 %v999, %v998
        %v1004 = vadd.f32 %v991, %v1000
        %v1005 = vadd.f32 %v992, %v1001
        %v1006 = vadd.f32 %v993, %v1002
        %v1007 = vadd.f32 %v994, %v1003
        %1008 = vst [vmem:[%s391 + $0x20] sm:$0xff] %v1004
        %1009 = vst [vmem:[%s391 + $0x28] sm:$0xff] %v1005
        %1010 = vst [vmem:[%s391 + $0x30] sm:$0xff] %v1006
        %1011 = vst [vmem:[%s391 + $0x38] sm:$0xff] %v1007
        %s1012 = sand.u32 %s251, 1
        %s1013 = scalar_lea.sflag [#allocation4], %s1012
        %s1014 = sand.u32 %s251, 1
        %s1015 = smul.addr %s1014, 64
        %s1016 = scalar_lea.vmem [#allocation7], %s1015
        // Predicated region
        $region69: #{tpu_custom_call.1} parent=59 // pred_check
          %p1017 = pneg %p261
        $region70: #{tpu_custom_call.1} parent=59 // pred_check_branch
          %1019 = sbr.rel (%p1017) target = $region72
        $region71: #{tpu_custom_call.1} parent=59 // pred_region
          %s1021 = ssub.s32 1024, 1024
          %1022 = vsyncadd %s1013, %s1021
          %s1023 = smul.addr %s28, 8
          %s1024 = smul.addr %s1023, 128
          %s1025 = scalar_lea.hbm %s10, %s1024
          %s1026 = sshll.u32 %s1016, 4
          %s1027 = int_to_ptr.vmem [resolvable:$true] %s1026
          %1032 = dma.vmem_to_hbm [thread:$0]  %s1027, 1024, %s1025, %s1013, 256, 256, 16
        $region72: #{tpu_custom_call.1} parent=59 // pred_fallthru
          _
      $region60: #{tpu_custom_call.1} parent=5 // pred_fallthru
        _
      %p1033 = scmp.le.s32.totalorder 2, %s23
      // Predicated region
      $region73: #{tpu_custom_call.1} parent=5 // pred_check
        %p1034 = pneg %p1033
      $region74: #{tpu_custom_call.1} parent=5 // pred_check_branch
        %1036 = sbr.rel (%p1034) target = $region76
      $region75: #{tpu_custom_call.1} parent=5 // pred_region
        %s1037 = ssub.s32 %s23, 2
        // Predicated region
        $region77: #{tpu_custom_call.1} parent=75 // pred_check
          %p1038 = pneg %p267
        $region78: #{tpu_custom_call.1} parent=75 // pred_check_branch
          %1040 = sbr.rel (%p1038) target = $region80
        $region79: #{tpu_custom_call.1} parent=75 // pred_region
          %s1041 = sand.u32 %s252, 1
          %s1042 = scalar_lea.sflag [#allocation4], %s1041
          %s1043 = sand.u32 %s252, 1
          %s1044 = smul.addr %s1043, 64
          %s1045 = scalar_lea.vmem [#allocation7], %s1044
          %1046 = dma.done %s1042, 1024
        $region80: #{tpu_custom_call.1} parent=75 // pred_fallthru
          _
      $region76: #{tpu_custom_call.1} parent=5 // pred_fallthru
        _
    $region6: #{tpu_custom_call.1} parent=1 // loop_footer
      %s27 = sadd.s32 1, %s23
    $region7: #{tpu_custom_call.1} parent=1 // loop_footer_branch
      %22 = sbr.rel target = $region3
    $region8: #{tpu_custom_call.1} parent=1 // loop_exit
      _
    %1047 = vsyncpa [#allocation3], 1
    %s1048 = scalar_lea.sflag [#allocation3], 1
    %1049 = vsyncpa %s1048, 1
    %1050 = vsyncpa [#allocation4], 1
    %s1051 = scalar_lea.sflag [#allocation4], 1
    %1052 = vsyncpa %s1051, 1
    %1053 = vsyncpa [#allocation5], 1
    %s1054 = scalar_lea.sflag [#allocation5], 1
    %1055 = vsyncpa %s1054, 1

</llo_original>
